<compile_context>
chip_gen: v7x
topology: tpu7x:2x2x1
jax: 0.10.0
libtpu: 0.0.40
codegen_flags: <defaults>
</compile_context>

<pallas_src>
import functools

import jax
import jax.numpy as jnp
from jax.experimental import pallas as pl
from jax.experimental.pallas import tpu as pltpu


def _round_up(x, m):
    return (x + m - 1) // m * m


def fair_forward_kernel(n_x_feats, w_ref, b_ref, s_ref, xT_ref, h_ref, p_ref):
    # w_ref: (F,) f32 in SMEM, b_ref: (1,) f32 in SMEM
    # s_ref: (1, TN) f32 VMEM, xT_ref: (n_x_feats, TN) f32 VMEM
    # h_ref, p_ref: (1, TN) f32 VMEM (lane-dense outputs)
    acc = s_ref[...] * w_ref[0] + b_ref[0]          # sensitive attr term + bias
    x = xT_ref[...]                                  # (n_x_feats, TN)
    for f in range(n_x_feats):                       # static unroll (F-1 is tiny)
        acc = acc + x[f:f + 1, :] * w_ref[f + 1]     # scalar-broadcast VPU FMA
    h_ref[...] = acc
    # exp goes to the EUP slot; exact divide keeps bit-accuracy vs. the reference.
    p_ref[...] = 1.0 / (1.0 + jnp.exp(-acc))


@functools.partial(jax.jit, static_argnames=("tile_n",))
def fair_model_forward(s, X, weight, bias, *, tile_n=4096):
    """Equivalent of FairModel.forward(s, X) -> (h.squeeze(), p.squeeze()).

    s: (N,) float, X: (N, F-1) float,
    weight: (1, F) float (nn.Linear weight), bias: (1,) float.
    """
    s = jnp.asarray(s, jnp.float32).reshape(-1)
    X = jnp.asarray(X, jnp.float32)
    w = jnp.asarray(weight, jnp.float32).reshape(-1)     # (F,)
    b = jnp.asarray(bias, jnp.float32).reshape(-1)       # (1,)

    N = s.shape[0]
    n_x_feats = X.shape[1]                               # F - 1

    # Sample/lane tiling: TN is a multiple of 128; Npad a multiple of TN.
    tn = min(tile_n, _round_up(N, 128))
    n_pad = _round_up(N, tn)
    grid = (n_pad // tn,)

    # Transposed, lane-dense operands (samples on lanes). s and X are kept as
    # separate inputs (no (N, F) concat materialized); zero-padded lanes past N
    # only produce h = b rows that are sliced away below.
    s_row = jnp.zeros((1, n_pad), jnp.float32).at[0, :N].set(s)
    xT = jnp.zeros((n_x_feats, n_pad), jnp.float32).at[:, :N].set(X.T)

    h_row, p_row = pl.pallas_call(
        functools.partial(fair_forward_kernel, n_x_feats),
        out_shape=(
            jax.ShapeDtypeStruct((1, n_pad), jnp.float32),
            jax.ShapeDtypeStruct((1, n_pad), jnp.float32),
        ),
        grid=grid,
        in_specs=[
            pl.BlockSpec(memory_space=pltpu.MemorySpace.SMEM),      # weight (F,)
            pl.BlockSpec(memory_space=pltpu.MemorySpace.SMEM),      # bias (1,)
            pl.BlockSpec((1, tn), lambda i: (0, i)),                # s row tile
            pl.BlockSpec((n_x_feats, tn), lambda i: (0, i)),        # X^T tile
        ],
        out_specs=(
            pl.BlockSpec((1, tn), lambda i: (0, i)),                # h tile
            pl.BlockSpec((1, tn), lambda i: (0, i)),                # p tile
        ),
        compiler_params=pltpu.CompilerParams(
            dimension_semantics=("parallel",),        # shard rows across TCs (v7x)
            vmem_limit_bytes=32 * 1024 * 1024,        # explicit, v7x-safe headroom
        ),
    )(w, b, s_row, xT)

    h = h_row[0, :N]   # h.squeeze()
    p = p_row[0, :N]   # p.squeeze()
    return h, p


# TODO(synk): training loop / Adam / BCELoss / fairness-constraint terms of
# FairModel are host-side logic, not part of forward; only forward is kernelized.


if __name__ == "__main__":
    key = jax.random.PRNGKey(0)
    k_w, k_s, k_x = jax.random.split(key, 3)

    N = 8            # batch of samples
    n_features = 5   # linear input dim (= 1 sensitive attr + 4 features)

    weight = jax.random.normal(k_w, (1, n_features), dtype=jnp.float32)
    bias = jnp.zeros((1,), jnp.float32)

    s = (jax.random.uniform(k_s, (N,)) > 0.5).astype(jnp.float32)
    X = jax.random.normal(k_x, (N, n_features - 1), dtype=jnp.float32)

    h, p = fair_model_forward(s, X, weight, bias)
    jax.block_until_ready((h, p))

    # Reference check in plain JAX.
    Xs = jnp.concatenate([s.reshape(-1, 1), X], axis=1)
    h_ref = Xs @ weight[0] + bias[0]
    p_ref = jax.nn.sigmoid(h_ref)
    assert h.shape == (N,) and p.shape == (N,)
    assert jnp.allclose(h, h_ref, atol=1e-5), "h mismatch"
    assert jnp.allclose(p, p_ref, atol=1e-5), "p mismatch"

    # Small multi-tile run to exercise the row grid + ragged padding path.
    N2 = 300
    s2 = (jax.random.uniform(k_s, (N2,)) > 0.5).astype(jnp.float32)
    X2 = jax.random.normal(k_x, (N2, n_features - 1), dtype=jnp.float32)
    h2, p2 = fair_model_forward(s2, X2, weight, bias, tile_n=128)
    jax.block_until_ready((h2, p2))
    Xs2 = jnp.concatenate([s2.reshape(-1, 1), X2], axis=1)
    h2_ref = Xs2 @ weight[0] + bias[0]
    assert jnp.allclose(h2, h2_ref, atol=1e-5), "h2 mismatch"
    assert jnp.allclose(p2, jax.nn.sigmoid(h2_ref), atol=1e-5), "p2 mismatch"

    print("KERNEL_OK")
</pallas_src>

<mosaic_0001>
module attributes {stable_mosaic.version = 11 : i64} {
  func.func @fair_forward_kernel(%arg0: i32, %arg1: memref<5xf32, #tpu.memory_space<smem>>, %arg2: memref<1xf32, #tpu.memory_space<smem>>, %arg3: memref<1x128xf32, #tpu.memory_space<vmem>>, %arg4: memref<4x128xf32, #tpu.memory_space<vmem>>, %arg5: memref<1x128xf32, #tpu.memory_space<vmem>>, %arg6: memref<1x128xf32, #tpu.memory_space<vmem>>) attributes {dimension_semantics = [#tpu.dimension_semantics<parallel>], iteration_bounds = array<i64: 1>, scalar_prefetch = 0 : i64, scratch_operands = 0 : i64, tpu.core_type = #tpu.core_type<tc>, window_params = [{transform_indices = @transform_0, window_bounds = array<i64: 5>}, {transform_indices = @transform_1, window_bounds = array<i64: 1>}, {transform_indices = @transform_2, window_bounds = array<i64: 1, 128>}, {transform_indices = @transform_3, window_bounds = array<i64: 4, 128>}, {transform_indices = @transform_4, window_bounds = array<i64: 1, 128>}, {transform_indices = @transform_5, window_bounds = array<i64: 1, 128>}]} {
    %c0 = arith.constant 0 : index
    %c0_0 = arith.constant 0 : index
    %0 = vector.load %arg3[%c0, %c0_0] : memref<1x128xf32, #tpu.memory_space<vmem>>, vector<1x128xf32>
    %c0_1 = arith.constant 0 : index
    %1 = memref.load %arg1[%c0_1] : memref<5xf32, #tpu.memory_space<smem>>
    %2 = vector.broadcast %1 : f32 to vector<1x128xf32>
    %3 = arith.mulf %0, %2 : vector<1x128xf32>
    %c0_2 = arith.constant 0 : index
    %4 = memref.load %arg2[%c0_2] : memref<1xf32, #tpu.memory_space<smem>>
    %5 = vector.broadcast %4 : f32 to vector<1x128xf32>
    %6 = arith.addf %3, %5 : vector<1x128xf32>
    %c0_3 = arith.constant 0 : index
    %c0_4 = arith.constant 0 : index
    %7 = vector.load %arg4[%c0_3, %c0_4] : memref<4x128xf32, #tpu.memory_space<vmem>>, vector<4x128xf32>
    %8 = vector.extract_strided_slice %7 {offsets = [0, 0], sizes = [1, 128], strides = [1, 1]} : vector<4x128xf32> to vector<1x128xf32>
    %c1 = arith.constant 1 : index
    %9 = memref.load %arg1[%c1] : memref<5xf32, #tpu.memory_space<smem>>
    %10 = vector.broadcast %9 : f32 to vector<1x128xf32>
    %11 = arith.mulf %8, %10 : vector<1x128xf32>
    %12 = arith.addf %6, %11 : vector<1x128xf32>
    %13 = vector.extract_strided_slice %7 {offsets = [1, 0], sizes = [1, 128], strides = [1, 1]} : vector<4x128xf32> to vector<1x128xf32>
    %c2 = arith.constant 2 : index
    %14 = memref.load %arg1[%c2] : memref<5xf32, #tpu.memory_space<smem>>
    %15 = vector.broadcast %14 : f32 to vector<1x128xf32>
    %16 = arith.mulf %13, %15 : vector<1x128xf32>
    %17 = arith.addf %12, %16 : vector<1x128xf32>
    %18 = vector.extract_strided_slice %7 {offsets = [2, 0], sizes = [1, 128], strides = [1, 1]} : vector<4x128xf32> to vector<1x128xf32>
    %c3 = arith.constant 3 : index
    %19 = memref.load %arg1[%c3] : memref<5xf32, #tpu.memory_space<smem>>
    %20 = vector.broadcast %19 : f32 to vector<1x128xf32>
    %21 = arith.mulf %18, %20 : vector<1x128xf32>
    %22 = arith.addf %17, %21 : vector<1x128xf32>
    %23 = vector.extract_strided_slice %7 {offsets = [3, 0], sizes = [1, 128], strides = [1, 1]} : vector<4x128xf32> to vector<1x128xf32>
    %c4 = arith.constant 4 : index
    %24 = memref.load %arg1[%c4] : memref<5xf32, #tpu.memory_space<smem>>
    %25 = vector.broadcast %24 : f32 to vector<1x128xf32>
    %26 = arith.mulf %23, %25 : vector<1x128xf32>
    %27 = arith.addf %22, %26 : vector<1x128xf32>
    %c0_5 = arith.constant 0 : index
    %c0_6 = arith.constant 0 : index
    %28 = vector.load %arg5[%c0_5, %c0_6] : memref<1x128xf32, #tpu.memory_space<vmem>>, vector<1x128xf32>
    tpu.vector_store %arg5[%c0_5, %c0_6], %27 {strides = array<i32>} : memref<1x128xf32, #tpu.memory_space<vmem>>, vector<1x128xf32>,
    %cst = arith.constant 0.000000e+00 : f32
    %29 = vector.broadcast %cst : f32 to vector<1x128xf32>
    %30 = arith.subf %29, %27 : vector<1x128xf32>
    %31 = math.exp %30 : vector<1x128xf32>
    %cst_7 = arith.constant 1.000000e+00 : f32
    %32 = vector.broadcast %cst_7 : f32 to vector<1x128xf32>
    %33 = arith.addf %32, %31 : vector<1x128xf32>
    %cst_8 = arith.constant 1.000000e+00 : f32
    %34 = vector.broadcast %cst_8 : f32 to vector<1x128xf32>
    %35 = arith.divf %34, %33 : vector<1x128xf32>
    %c0_9 = arith.constant 0 : index
    %c0_10 = arith.constant 0 : index
    %36 = vector.load %arg6[%c0_9, %c0_10] : memref<1x128xf32, #tpu.memory_space<vmem>>, vector<1x128xf32>
    tpu.vector_store %arg6[%c0_9, %c0_10], %35 {strides = array<i32>} : memref<1x128xf32, #tpu.memory_space<vmem>>, vector<1x128xf32>,
    return
  }
  func.func @transform_0(%arg0: i32) -> i32 {
    %c0_i32 = arith.constant 0 : i32
    %c0_i32_0 = arith.constant 0 : i32
    return %c0_i32 : i32
  }
  func.func @transform_1(%arg0: i32) -> i32 {
    %c0_i32 = arith.constant 0 : i32
    %c0_i32_0 = arith.constant 0 : i32
    return %c0_i32 : i32
  }
  func.func @transform_2(%arg0: i32) -> (i32, i32) {
    %c0_i32 = arith.constant 0 : i32
    %c0_i32_0 = arith.constant 0 : i32
    return %c0_i32, %arg0 : i32, i32
  }
  func.func @transform_3(%arg0: i32) -> (i32, i32) {
    %c0_i32 = arith.constant 0 : i32
    %c0_i32_0 = arith.constant 0 : i32
    return %c0_i32, %arg0 : i32, i32
  }
  func.func @transform_4(%arg0: i32) -> (i32, i32) {
    %c0_i32 = arith.constant 0 : i32
    %c0_i32_0 = arith.constant 0 : i32
    return %c0_i32, %arg0 : i32, i32
  }
  func.func @transform_5(%arg0: i32) -> (i32, i32) {
    %c0_i32 = arith.constant 0 : i32
    %c0_i32_0 = arith.constant 0 : i32
    return %c0_i32, %arg0 : i32, i32
  }
}

</mosaic_0001>

<llo_original>
// kernel: fair_model_forward.1
$region0: #{fair_model_forward.1}
  #allocation0 [shape = 'u32[]', space=smem, size = 0x4, offset = 0x4, fixed_abs, tag = 'smem constant byte address 0x4 - core index']
  #allocation1 [shape = 'u32[144,128]{1,0:T(1,128)}', space=vmem, size = 0x12000, scoped, tag = 'internal scratch']
  #allocation2 [shape = 'f32[1]{0:T(128)S(6)}', space=smem, size = 0x200, scoped, tag = 'scoped memory for fair_model_forward.1']
  %s0 = inlined_call_operand.vmem [shape: f32[5], index: 0, kind: input, shape index: {}]
  %s1 = inlined_call_operand.<no memory space> [shape: f32[1], index: 1, kind: input, shape index: {}]
  %s2 = inlined_call_operand.vmem [shape: f32[1,128], index: 2, kind: input, shape index: {}]
  %s3 = inlined_call_operand.vmem [shape: f32[4,128], index: 3, kind: input, shape index: {}]
  %s4 = inlined_call_operand.vmem [shape: f32[1,128], index: 4, kind: output, shape index: {0}]
  %s5 = inlined_call_operand.vmem [shape: f32[1,128], index: 5, kind: output, shape index: {1}]
  %6 = xla_tuple %s4, %s5
  %s7 = sld [smem:[#allocation0]]
  $region38: #{fair_model_forward.1} parent=0
    _
  %s9 = ssub.s32 1, %s7
  %s10 = scalar_select 0, %s9, %s7
  %11 = sst [smem:[#allocation2]] %s1
  $region1: #{fair_model_forward.1} parent=0
    #allocation3 [shape = 'u8[512]{0}', space=smem, size = 0x200, scoped, tag = 'input window, operand 0, single buffered']
    #allocation4 [shape = 's32[1]{0}', space=sflag, size = 0x4, scoped, tag = 'scoped memory for fair_model_forward.1']
    %12 = vsyncpa [#allocation4], 0
    // Predicated region
    $region2: #{fair_model_forward.1} parent=1 // pred_check
      _
    $region3: #{fair_model_forward.1} parent=1 // pred_check_branch
      %14 = sbr.rel (0) target = $region5
    $region4: #{fair_model_forward.1} parent=1 // pred_region
      %s16 = ssub.s32 16, 16
      %17 = vsyncadd [#allocation4], %s16
      %s19 = sshll.u32 %s0, 4
      %s20 = int_to_ptr.vmem [resolvable:$true] %s19
      %22 = dma.vmem_to_smem %s20, 16, [#allocation3], [#allocation4]
    $region5: #{fair_model_forward.1} parent=1 // pred_fallthru
      _
    // Predicated region
    $region6: #{fair_model_forward.1} parent=1 // pred_check
      _
    $region7: #{fair_model_forward.1} parent=1 // pred_check_branch
      %24 = sbr.rel (0) target = $region9
    $region8: #{fair_model_forward.1} parent=1 // pred_region
      _
    $region9: #{fair_model_forward.1} parent=1 // pred_fallthru
      _
    // Predicated region
    $region10: #{fair_model_forward.1} parent=1 // pred_check
      _
    $region11: #{fair_model_forward.1} parent=1 // pred_check_branch
      %26 = sbr.rel (0) target = $region13
    $region12: #{fair_model_forward.1} parent=1 // pred_region
      _
    $region13: #{fair_model_forward.1} parent=1 // pred_fallthru
      _
    // Predicated region
    $region14: #{fair_model_forward.1} parent=1 // pred_check
      _
    $region15: #{fair_model_forward.1} parent=1 // pred_check_branch
      %28 = sbr.rel (0) target = $region17
    $region16: #{fair_model_forward.1} parent=1 // pred_region
      _
    $region17: #{fair_model_forward.1} parent=1 // pred_fallthru
      _
    // Predicated region
    $region18: #{fair_model_forward.1} parent=1 // pred_check
      _
    $region19: #{fair_model_forward.1} parent=1 // pred_check_branch
      %30 = sbr.rel (0) target = $region21
    $region20: #{fair_model_forward.1} parent=1 // pred_region
      %31 = dma.done [#allocation4], 16
    $region21: #{fair_model_forward.1} parent=1 // pred_fallthru
      _
    %32 = sfence
    %v33 = vld [vmem:[%s2] sm:$0x1]
    %s34 = sld [smem:[#allocation3]]
    %v35 = vstv %s34
    %v36 = vmul.f32 %v33, %v35
    %s37 = sld [smem:[#allocation2]]
    %v38 = vstv %s37
    %v39 = vadd.f32 %v36, %v38
    %v40 = vld [vmem:[%s3] sm:$0xf]
    %s41 = sld [smem:[#allocation3 + $0x1]]
    %v42 = vstv %s41
    %v43 = vmul.f32 %v40, %v42
    %v44 = vadd.f32 %v39, %v43
    %s45 = sld [smem:[#allocation3 + $0x2]]
    %v46 = vstv %s45
    %v47 = vmul.f32 %v40, %v46
    %v50 = vunpack.c.l.s4 1966171168
    %v51 = vunpack.c.0.s8 %v50
    %v52 = vlaneseq
    %v53 = vshrl.u32 %v52, 7
    %v54 = vsub.s32 %v51, %v53
    %v55 = vrot.slane %v47, %v54
    %v56 = vcombine.high %v55, %v55
    %v58 = vunpack.c.l.s4 1966171168
    %v59 = vunpack.c.0.s8 %v58
    %v60 = vlaneseq
    %v61 = vshrl.u32 %v60, 7
    %v62 = vsub.s32 %v59, %v61
    %v63 = vrot.slane %v56, %v62
    %v65 = vadd.f32 %v44, %v63
    %s66 = sld [smem:[#allocation3 + $0x3]]
    %v67 = vstv %s66
    %v68 = vmul.f32 %v40, %v67
    %v71 = vunpack.c.l.s4 1966171168
    %v72 = vunpack.c.0.s8 %v71
    %v73 = vlaneseq
    %v74 = vshrl.u32 %v73, 7
    %v75 = vsub.s32 %v72, %v74
    %v76 = vrot.slane %v68, %v75
    %v78 = vunpack.c.l.s4 1966171168
    %v79 = vunpack.c.0.s8 %v78
    %v80 = vlaneseq
    %v81 = vshrl.u32 %v80, 7
    %v82 = vsub.s32 %v79, %v81
    %v83 = vrot.slane %v76, %v82
    %v84 = vcombine.high %v83, %v83
    %v86 = vadd.f32 %v65, %v84
    %s87 = sld [smem:[#allocation3 + $0x4]]
    %v88 = vstv %s87
    %v89 = vmul.f32 %v40, %v88
    %v92 = vunpack.c.l.s4 1966171168
    %v93 = vunpack.c.0.s8 %v92
    %v94 = vlaneseq
    %v95 = vshrl.u32 %v94, 7
    %v96 = vsub.s32 %v93, %v95
    %v97 = vrot.slane %v89, %v96
    %v98 = vcombine.high %v97, %v97
    %v100 = vunpack.c.l.s4 1966171168
    %v101 = vunpack.c.0.s8 %v100
    %v102 = vlaneseq
    %v103 = vshrl.u32 %v102, 7
    %v104 = vsub.s32 %v101, %v103
    %v105 = vrot.slane %v98, %v104
    %v106 = vcombine.high %v105, %v105
    %v108 = vadd.f32 %v86, %v106
    %109 = vst [vmem:[%s4] sm:$0x1] %v108
    %v110 = vsub.f32 0.0, %v108
    %v111 = vmul.f32 %v110, 1.442695
    %v112 = vpow.pop %v111
    %v113 = vadd.f32 %v112, 1.0
    %v114 = vrcp.pop %v113
    %v115 = vmul.f32 1.0, %v114
    %116 = vst [vmem:[%s5] sm:$0x1] %v115
    // Predicated region
    $region22: #{fair_model_forward.1} parent=1 // pred_check
      _
    $region23: #{fair_model_forward.1} parent=1 // pred_check_branch
      %118 = sbr.rel (0) target = $region25
    $region24: #{fair_model_forward.1} parent=1 // pred_region
      _
    $region25: #{fair_model_forward.1} parent=1 // pred_fallthru
      _
    // Predicated region
    $region26: #{fair_model_forward.1} parent=1 // pred_check
      _
    $region27: #{fair_model_forward.1} parent=1 // pred_check_branch
      %120 = sbr.rel (0) target = $region29
    $region28: #{fair_model_forward.1} parent=1 // pred_region
      _
    $region29: #{fair_model_forward.1} parent=1 // pred_fallthru
      _
    // Predicated region
    $region30: #{fair_model_forward.1} parent=1 // pred_check
      _
    $region31: #{fair_model_forward.1} parent=1 // pred_check_branch
      %122 = sbr.rel (0) target = $region33
    $region32: #{fair_model_forward.1} parent=1 // pred_region
      _
    $region33: #{fair_model_forward.1} parent=1 // pred_fallthru
      _
    // Predicated region
    $region34: #{fair_model_forward.1} parent=1 // pred_check
      _
    $region35: #{fair_model_forward.1} parent=1 // pred_check_branch
      %124 = sbr.rel (0) target = $region37
    $region36: #{fair_model_forward.1} parent=1 // pred_region
      _
    $region37: #{fair_model_forward.1} parent=1 // pred_fallthru
      _
    %125 = vsyncpa [#allocation4], 1

</llo_original>
